<compile_context>
chip_gen: v7x
topology: tpu7x:2x2x1
jax: 0.10.0
libtpu: 0.0.40
codegen_flags: <defaults>
</compile_context>

<pallas_src>
import functools
import math

import jax
import jax.numpy as jnp
from jax.experimental import pallas as pl
from jax.experimental.pallas import tpu as pltpu

_LANE = 128
_SUBLANE = 16     # bf16 packs 16 rows per (16,128) tile


def _round_up(x, m):
    return ((x + m - 1) // m) * m


def _invariant_spec(shape):
    """Whole-array block, constant index map, single-buffered (never refetched)."""
    nd = len(shape)
    return pl.BlockSpec(shape, lambda it, _nd=nd: (0,) * _nd,
                        pipeline_mode=pl.Buffered(1))


def _resident_spec(shape):
    """Whole-array output block with a constant index map (VMEM-resident across grid)."""
    nd = len(shape)
    return pl.BlockSpec(shape, lambda it, _nd=nd: (0,) * _nd)


# ----------------------------- Pallas kernel --------------------------------
def _fused_mrf_kernel(meta, *refs):
    """All MRF iterations; one grid step == one message-passing iteration.

    refs = (x0_t... [HBM], bias_t..., adj_e..., inv_cnt_t..., W_e..., out_t..., init_sem)

    Output refs have a constant index_map, so they stay resident in VMEM across the
    "arbitrary" grid axis and carry the per-node-type feature state between iterations.
    """
    nts = meta["nts"]
    adj_nts = meta["adj_nts"]
    n_nt = len(nts)
    n_adj = len(adj_nts)
    n_e = meta["num_edges"]

    p = 0
    x0_refs = refs[p:p + n_nt]; p += n_nt            # HBM (pl.ANY), read once at it == 0
    bias_refs = refs[p:p + n_nt]; p += n_nt          # f32 (1, Dp)
    adj_refs = refs[p:p + n_e]; p += n_e             # bf16 (N_dst, N_src), per edge type
    inv_refs = dict(zip(adj_nts, refs[p:p + n_adj])); p += n_adj   # f32 (N_dst, 1)
    w_refs = refs[p:p + n_e]; p += n_e               # bf16 (Dp, Dp), per edge type
    out_refs = refs[p:p + n_nt]; p += n_nt           # f32 feature state (N, Dp)
    init_sem = refs[p]                               # DMA semaphores (one per node type)

    nt_idx = {t: i for i, t in enumerate(nts)}
    it = pl.program_id(0)

    @pl.when(it == 0)
    def _init():
        # Pull initial features from HBM into the resident output blocks exactly once.
        copies = [pltpu.make_async_copy(x0_refs[i], out_refs[i], init_sem.at[i])
                  for i in range(n_nt)]
        for c in copies:
            c.start()
        for c in copies:
            c.wait()

    # Jacobi update: snapshot ALL current features before writing any of them back.
    cur = [out_refs[i][...] for i in range(n_nt)]
    cur_bf16 = [c.astype(jnp.bfloat16) for c in cur]

    new_vals = []
    for i, t in enumerate(nts):
        edges = meta["dst_edges"][t]                 # ((src_node_type, edge_idx), ...)
        if edges:
            msgs = None
            for (s, e_i) in edges:
                # (N_src, Dp): bf16 x bf16 -> f32 on MXU
                m = jnp.dot(cur_bf16[nt_idx[s]], w_refs[e_i][...],
                            preferred_element_type=jnp.float32)
                # (N_dst, Dp): bf16 x bf16 -> f32 on MXU; accumulate per edge (no concat)
                part = jnp.dot(adj_refs[e_i][...], m.astype(jnp.bfloat16),
                               preferred_element_type=jnp.float32)
                msgs = part if msgs is None else msgs + part
            msgs = msgs * inv_refs[t][...]           # precomputed 1/message_count (VPU)
        else:
            msgs = jnp.zeros_like(cur[i])
        new_vals.append(cur[i] + jnp.maximum(msgs + bias_refs[i][...], 0.0))

    for i in range(n_nt):
        out_refs[i][...] = new_vals[i]


# ------------------------------ JAX glue -------------------------------------
def mrf_correction_forward(x_dict, edge_index_dict, edge_weights, node_biases,
                           node_types, edge_types, hidden_dim, num_iterations=3):
    nts = [t for t in node_types if t in x_dict]
    d_p = _round_up(hidden_dim, _LANE)
    n_p = {t: _round_up(x_dict[t].shape[0], _SUBLANE) for t in nts}

    def pad2(a, rows, cols, dtype=jnp.float32):
        a = jnp.asarray(a, jnp.float32)
        out = jnp.zeros((rows, cols), jnp.float32).at[:a.shape[0], :a.shape[1]].set(a)
        return out.astype(dtype)

    x0 = [pad2(x_dict[t], n_p[t], d_p) for t in nts]                    # f32, aliased to out
    bias = [pad2(node_biases[t].reshape(1, -1), 1, d_p) for t in nts]   # f32

    active_edges = [(s, r, d) for (s, r, d) in edge_types
                    if (s, r, d) in edge_index_dict and s in x_dict and d in x_dict]

    dst_edges = {t: [] for t in nts}
    adj_list, w_list = [], []
    cnt = {t: jnp.zeros((n_p[t], 1), jnp.float32) for t in nts}
    for e_i, (s, r, d) in enumerate(active_edges):
        ei = edge_index_dict[(s, r, d)]
        adj = jnp.zeros((n_p[d], n_p[s]), jnp.float32).at[ei[1], ei[0]].add(1.0)
        cnt[d] = cnt[d] + jnp.sum(adj, axis=1, keepdims=True)   # iteration-invariant counts
        adj_list.append(adj.astype(jnp.bfloat16))   # small integer counts: exact in bf16
        w_list.append(pad2(edge_weights[f'{s}_{r}_{d}'], d_p, d_p, jnp.bfloat16))
        dst_edges[d].append((s, e_i))

    adj_nts = [t for t in nts if dst_edges[t]]
    inv_cnt = [jnp.where(cnt[t] > 0.0, 1.0 / jnp.maximum(cnt[t], 1.0), 1.0)
               for t in adj_nts]

    inputs = x0 + bias + adj_list + inv_cnt + w_list

    meta = {"nts": tuple(nts), "adj_nts": tuple(adj_nts),
            "dst_edges": {t: tuple(dst_edges[t]) for t in nts},
            "num_edges": len(active_edges)}

    # ---- resource hints ------------------------------------------------------
    def _nbytes(a):
        return int(a.size) * a.dtype.itemsize

    feat_bytes = sum(n_p[t] * d_p * 4 for t in nts)
    invariant_bytes = sum(_nbytes(a) for a in bias + adj_list + inv_cnt + w_list)
    # single-buffered invariant inputs + resident outputs (<=2 bufs) + f32 temporaries
    working_set = invariant_bytes + 2 * feat_bytes + 8 * feat_bytes
    vmem_limit = int(min(max(2 * working_set, 16 * 1024 * 1024), 48 * 1024 * 1024))

    flops_per_iter = 0
    for (s, _, d) in active_edges:
        flops_per_iter += 2 * n_p[s] * d_p * d_p          # x_src @ W
        flops_per_iter += 2 * n_p[d] * n_p[s] * d_p       # adj @ m
    cost = pl.CostEstimate(
        flops=num_iterations * flops_per_iter,
        transcendentals=0,
        bytes_accessed=sum(_nbytes(a) for a in inputs) + 2 * feat_bytes)

    in_specs = ([pl.BlockSpec(memory_space=pl.ANY) for _ in x0]      # x0 stays in HBM
                + [_invariant_spec(a.shape) for a in bias]
                + [_invariant_spec(a.shape) for a in adj_list]
                + [_invariant_spec(a.shape) for a in inv_cnt]
                + [_invariant_spec(a.shape) for a in w_list])

    kernel = functools.partial(_fused_mrf_kernel, meta)
    out_shape = tuple(jax.ShapeDtypeStruct((n_p[t], d_p), jnp.float32) for t in nts)
    outs = pl.pallas_call(
        kernel,
        out_shape=out_shape,
        grid=(num_iterations,),
        in_specs=in_specs,
        out_specs=tuple(_resident_spec((n_p[t], d_p)) for t in nts),
        scratch_shapes=[pltpu.SemaphoreType.DMA((len(nts),))],
        input_output_aliases={i: i for i in range(len(nts))},   # x0_i aliases out_i (HBM)
        compiler_params=pltpu.CompilerParams(
            dimension_semantics=("arbitrary",),
            vmem_limit_bytes=vmem_limit),
        cost_estimate=cost,
    )(*inputs)
    if not isinstance(outs, (tuple, list)):
        outs = (outs,)
    return {t: outs[i][:x_dict[t].shape[0], :hidden_dim] for i, t in enumerate(nts)}


# --------------------------- pure-JAX reference -------------------------------
def reference_forward(x_dict, edge_index_dict, edge_weights, node_biases,
                      node_types, edge_types, num_iterations=3):
    hp = jax.lax.Precision.HIGHEST
    current = dict(x_dict)
    for _ in range(num_iterations):
        new = {}
        for nt in node_types:
            if nt not in current:
                continue
            msgs = jnp.zeros_like(current[nt])
            cnt = jnp.zeros((current[nt].shape[0],), jnp.float32)
            for (src, rel, dst) in edge_types:
                if dst == nt and (src, rel, dst) in edge_index_dict:
                    ei = edge_index_dict[(src, rel, dst)]
                    w = edge_weights[f'{src}_{rel}_{dst}']
                    contrib = jnp.matmul(current[src][ei[0]], w, precision=hp)
                    msgs = msgs.at[ei[1]].add(contrib)
                    cnt = cnt.at[ei[1]].add(1.0)
            mask = cnt > 0
            denom = jnp.where(mask, cnt, 1.0)[:, None]
            msgs = jnp.where(mask[:, None], msgs / denom, msgs)
            new[nt] = jax.nn.relu(msgs + node_biases[nt][None, :])
        for nt in new:
            current[nt] = current[nt] + new[nt]
    return current


# --------------------------------- main ---------------------------------------
if __name__ == "__main__":
    hidden_dim = 32
    num_iterations = 3
    node_types = ["user", "item"]
    edge_types = [("user", "rates", "item"),
                  ("item", "rev_rates", "user"),
                  ("user", "follows", "user")]
    n_nodes = {"user": 16, "item": 24}
    n_edges = {("user", "rates", "item"): 40,
               ("item", "rev_rates", "user"): 40,
               ("user", "follows", "user"): 24}

    key = jax.random.PRNGKey(0)

    # Parameter init (mirrors __init__: xavier_uniform weights, zero biases).
    edge_weights = {}
    for (src, rel, dst) in edge_types:
        key, sub = jax.random.split(key)
        limit = math.sqrt(6.0 / (hidden_dim + hidden_dim))
        edge_weights[f'{src}_{rel}_{dst}'] = jax.random.uniform(
            sub, (hidden_dim, hidden_dim), jnp.float32, -limit, limit)
    node_biases = {nt: jnp.zeros((hidden_dim,), jnp.float32) for nt in node_types}

    # Deterministic node features.
    x_dict = {}
    for nt in node_types:
        key, sub = jax.random.split(key)
        x_dict[nt] = jax.random.normal(sub, (n_nodes[nt], hidden_dim), jnp.float32)

    # Deterministic random COO edge indices.
    edge_index_dict = {}
    for (src, rel, dst) in edge_types:
        key, k1, k2 = jax.random.split(key, 3)
        e = n_edges[(src, rel, dst)]
        src_idx = jax.random.randint(k1, (e,), 0, n_nodes[src])
        dst_idx = jax.random.randint(k2, (e,), 0, n_nodes[dst])
        edge_index_dict[(src, rel, dst)] = jnp.stack([src_idx, dst_idx], axis=0)

    out = mrf_correction_forward(x_dict, edge_index_dict, edge_weights, node_biases,
                                 node_types, edge_types, hidden_dim, num_iterations)
    out = {k: jax.block_until_ready(v) for k, v in out.items()}

    ref = reference_forward(x_dict, edge_index_dict, edge_weights, node_biases,
                            node_types, edge_types, num_iterations)

    # Tolerances: the kernel feeds the MXU bf16 operands (f32 accumulate, per perf review)
    # while the reference runs f32 HIGHEST-precision matmuls, so expect ~1% relative drift
    # over 3 residual iterations.  Structural bugs produce O(1) / >30% errors, so these
    # thresholds remain meaningful.
    for nt in node_types:
        o, r = out[nt], ref[nt]
        assert o.shape == x_dict[nt].shape
        rel_fro = float(jnp.linalg.norm(o - r) / jnp.linalg.norm(r))
        assert rel_fro < 4e-2, f"{nt}: relative Frobenius error {rel_fro}"
        assert bool(jnp.allclose(o, r, rtol=5e-2, atol=1e-1)), f"elementwise mismatch for {nt}"

    print("KERNEL_OK")
</pallas_src>

<mosaic_0001>
module attributes {stable_mosaic.version = 11 : i64} {
  func.func @_fused_mrf_kernel(%arg0: i32, %arg1: memref<16x128xf32, #tpu.memory_space<any>>, %arg2: memref<32x128xf32, #tpu.memory_space<any>>, %arg3: memref<1x128xf32, #tpu.memory_space<vmem>>, %arg4: memref<1x128xf32, #tpu.memory_space<vmem>>, %arg5: memref<32x16xbf16, #tpu.memory_space<vmem>>, %arg6: memref<16x32xbf16, #tpu.memory_space<vmem>>, %arg7: memref<16x16xbf16, #tpu.memory_space<vmem>>, %arg8: memref<16x1xf32, #tpu.memory_space<vmem>>, %arg9: memref<32x1xf32, #tpu.memory_space<vmem>>, %arg10: memref<128x128xbf16, #tpu.memory_space<vmem>>, %arg11: memref<128x128xbf16, #tpu.memory_space<vmem>>, %arg12: memref<128x128xbf16, #tpu.memory_space<vmem>>, %arg13: memref<16x128xf32, #tpu.memory_space<vmem>>, %arg14: memref<32x128xf32, #tpu.memory_space<vmem>>, %arg15: memref<2x!tpu.dma_semaphore, #tpu.memory_space<semaphore_mem>>) attributes {dimension_semantics = [#tpu.dimension_semantics<arbitrary>], iteration_bounds = array<i64: 3>, scalar_prefetch = 0 : i64, scratch_operands = 1 : i64, tpu.core_type = #tpu.core_type<tc>, window_params = [{}, {}, {pipeline_mode = #tpu.pipeline_mode<synchronous>, transform_indices = @transform_2, window_bounds = array<i64: 1, 128>}, {pipeline_mode = #tpu.pipeline_mode<synchronous>, transform_indices = @transform_3, window_bounds = array<i64: 1, 128>}, {pipeline_mode = #tpu.pipeline_mode<synchronous>, transform_indices = @transform_4, window_bounds = array<i64: 32, 16>}, {pipeline_mode = #tpu.pipeline_mode<synchronous>, transform_indices = @transform_5, window_bounds = array<i64: 16, 32>}, {pipeline_mode = #tpu.pipeline_mode<synchronous>, transform_indices = @transform_6, window_bounds = array<i64: 16, 16>}, {pipeline_mode = #tpu.pipeline_mode<synchronous>, transform_indices = @transform_7, window_bounds = array<i64: 16, 1>}, {pipeline_mode = #tpu.pipeline_mode<synchronous>, transform_indices = @transform_8, window_bounds = array<i64: 32, 1>}, {pipeline_mode = #tpu.pipeline_mode<synchronous>, transform_indices = @transform_9, window_bounds = array<i64: 128, 128>}, {pipeline_mode = #tpu.pipeline_mode<synchronous>, transform_indices = @transform_10, window_bounds = array<i64: 128, 128>}, {pipeline_mode = #tpu.pipeline_mode<synchronous>, transform_indices = @transform_11, window_bounds = array<i64: 128, 128>}, {pipeline_mode = #tpu.pipeline_mode<synchronous>, transform_indices = @transform_12, window_bounds = array<i64: 16, 128>}, {pipeline_mode = #tpu.pipeline_mode<synchronous>, transform_indices = @transform_13, window_bounds = array<i64: 32, 128>}]} {
    %c0_i32 = arith.constant 0 : i32
    %0 = arith.cmpi eq, %arg0, %c0_i32 : i32
    %1 = arith.extui %0 : i1 to i32
    %c0_i32_0 = arith.constant 0 : i32
    %2 = arith.cmpi ne, %1, %c0_i32_0 : i32
    scf.if %2 {
      %c0_i32_35 = arith.constant 0 : i32
      %43 = tpu.memref_slice %arg15[%c0_i32_35] : memref<2x!tpu.dma_semaphore, #tpu.memory_space<semaphore_mem>> -> memref<1x!tpu.dma_semaphore, #tpu.memory_space<semaphore_mem>>
      %44 = tpu.memref_squeeze %43 : memref<1x!tpu.dma_semaphore, #tpu.memory_space<semaphore_mem>> -> memref<!tpu.dma_semaphore, #tpu.memory_space<semaphore_mem>>
      tpu.enqueue_dma source(%arg1 : memref<16x128xf32, #tpu.memory_space<any>>) target(%arg13 : memref<16x128xf32, #tpu.memory_space<vmem>>) target_semaphore(%44 : memref<!tpu.dma_semaphore, #tpu.memory_space<semaphore_mem>>)
      %c1_i32 = arith.constant 1 : i32
      %45 = tpu.memref_slice %arg15[%c1_i32] : memref<2x!tpu.dma_semaphore, #tpu.memory_space<semaphore_mem>> -> memref<1x!tpu.dma_semaphore, #tpu.memory_space<semaphore_mem>>
      %46 = tpu.memref_squeeze %45 : memref<1x!tpu.dma_semaphore, #tpu.memory_space<semaphore_mem>> -> memref<!tpu.dma_semaphore, #tpu.memory_space<semaphore_mem>>
      tpu.enqueue_dma source(%arg2 : memref<32x128xf32, #tpu.memory_space<any>>) target(%arg14 : memref<32x128xf32, #tpu.memory_space<vmem>>) target_semaphore(%46 : memref<!tpu.dma_semaphore, #tpu.memory_space<semaphore_mem>>)
      %c0_i32_36 = arith.constant 0 : i32
      %47 = tpu.memref_slice %arg15[%c0_i32_36] : memref<2x!tpu.dma_semaphore, #tpu.memory_space<semaphore_mem>> -> memref<1x!tpu.dma_semaphore, #tpu.memory_space<semaphore_mem>>
      %48 = tpu.memref_squeeze %47 : memref<1x!tpu.dma_semaphore, #tpu.memory_space<semaphore_mem>> -> memref<!tpu.dma_semaphore, #tpu.memory_space<semaphore_mem>>
      tpu.wait_dma2 semaphore(%48 : memref<!tpu.dma_semaphore, #tpu.memory_space<semaphore_mem>>) src(%arg1 : memref<16x128xf32, #tpu.memory_space<any>>) dst(%arg13 : memref<16x128xf32, #tpu.memory_space<vmem>>)
      %c1_i32_37 = arith.constant 1 : i32
      %49 = tpu.memref_slice %arg15[%c1_i32_37] : memref<2x!tpu.dma_semaphore, #tpu.memory_space<semaphore_mem>> -> memref<1x!tpu.dma_semaphore, #tpu.memory_space<semaphore_mem>>
      %50 = tpu.memref_squeeze %49 : memref<1x!tpu.dma_semaphore, #tpu.memory_space<semaphore_mem>> -> memref<!tpu.dma_semaphore, #tpu.memory_space<semaphore_mem>>
      tpu.wait_dma2 semaphore(%50 : memref<!tpu.dma_semaphore, #tpu.memory_space<semaphore_mem>>) src(%arg2 : memref<32x128xf32, #tpu.memory_space<any>>) dst(%arg14 : memref<32x128xf32, #tpu.memory_space<vmem>>)
    } else {
    }
    %c0 = arith.constant 0 : index
    %c0_1 = arith.constant 0 : index
    %3 = vector.load %arg13[%c0, %c0_1] : memref<16x128xf32, #tpu.memory_space<vmem>>, vector<16x128xf32>
    %c0_2 = arith.constant 0 : index
    %c0_3 = arith.constant 0 : index
    %4 = vector.load %arg14[%c0_2, %c0_3] : memref<32x128xf32, #tpu.memory_space<vmem>>, vector<32x128xf32>
    %5 = arith.truncf %3 : vector<16x128xf32> to vector<16x128xbf16>
    %6 = arith.truncf %4 : vector<32x128xf32> to vector<32x128xbf16>
    %c0_4 = arith.constant 0 : index
    %c0_5 = arith.constant 0 : index
    %7 = vector.load %arg11[%c0_4, %c0_5] : memref<128x128xbf16, #tpu.memory_space<vmem>>, vector<128x128xbf16>
    %cst = arith.constant dense<0.000000e+00> : vector<32x128xf32>
    %8 = tpu.matmul %6, %7, %cst {dimension_numbers = #tpu.dot_dimension_numbers<[1], [0], [0], [1], [0, 0, 1, 1], [], []>} : vector<32x128xbf16>, vector<128x128xbf16>, vector<32x128xf32> -> vector<32x128xf32>
    %c0_6 = arith.constant 0 : index
    %c0_7 = arith.constant 0 : index
    %9 = vector.load %arg6[%c0_6, %c0_7] : memref<16x32xbf16, #tpu.memory_space<vmem>>, vector<16x32xbf16>
    %10 = arith.truncf %8 : vector<32x128xf32> to vector<32x128xbf16>
    %cst_8 = arith.constant dense<0.000000e+00> : vector<16x128xf32>
    %11 = tpu.matmul %9, %10, %cst_8 {dimension_numbers = #tpu.dot_dimension_numbers<[1], [0], [0], [1], [0, 0, 1, 1], [], []>} : vector<16x32xbf16>, vector<32x128xbf16>, vector<16x128xf32> -> vector<16x128xf32>
    %c0_9 = arith.constant 0 : index
    %c0_10 = arith.constant 0 : index
    %12 = vector.load %arg12[%c0_9, %c0_10] : memref<128x128xbf16, #tpu.memory_space<vmem>>, vector<128x128xbf16>
    %cst_11 = arith.constant dense<0.000000e+00> : vector<16x128xf32>
    %13 = tpu.matmul %5, %12, %cst_11 {dimension_numbers = #tpu.dot_dimension_numbers<[1], [0], [0], [1], [0, 0, 1, 1], [], []>} : vector<16x128xbf16>, vector<128x128xbf16>, vector<16x128xf32> -> vector<16x128xf32>
    %c0_12 = arith.constant 0 : index
    %c0_13 = arith.constant 0 : index
    %14 = vector.load %arg7[%c0_12, %c0_13] : memref<16x16xbf16, #tpu.memory_space<vmem>>, vector<16x16xbf16>
    %15 = arith.truncf %13 : vector<16x128xf32> to vector<16x128xbf16>
    %cst_14 = arith.constant dense<0.000000e+00> : vector<16x128xf32>
    %16 = tpu.matmul %14, %15, %cst_14 {dimension_numbers = #tpu.dot_dimension_numbers<[1], [0], [0], [1], [0, 0, 1, 1], [], []>} : vector<16x16xbf16>, vector<16x128xbf16>, vector<16x128xf32> -> vector<16x128xf32>
    %17 = arith.addf %11, %16 : vector<16x128xf32>
    %c0_15 = arith.constant 0 : index
    %c0_16 = arith.constant 0 : index
    %18 = vector.load %arg8[%c0_15, %c0_16] : memref<16x1xf32, #tpu.memory_space<vmem>>, vector<16x1xf32>
    %19 = vector.broadcast %18 : vector<16x1xf32> to vector<16x128xf32>
    %20 = arith.mulf %17, %19 : vector<16x128xf32>
    %c0_17 = arith.constant 0 : index
    %c0_18 = arith.constant 0 : index
    %21 = vector.load %arg3[%c0_17, %c0_18] : memref<1x128xf32, #tpu.memory_space<vmem>>, vector<1x128xf32>
    %22 = vector.broadcast %21 : vector<1x128xf32> to vector<16x128xf32>
    %23 = arith.addf %20, %22 : vector<16x128xf32>
    %cst_19 = arith.constant 0.000000e+00 : f32
    %24 = vector.broadcast %cst_19 : f32 to vector<16x128xf32>
    %25 = arith.maximumf %23, %24 : vector<16x128xf32>
    %26 = arith.addf %3, %25 : vector<16x128xf32>
    %c0_20 = arith.constant 0 : index
    %c0_21 = arith.constant 0 : index
    %27 = vector.load %arg10[%c0_20, %c0_21] : memref<128x128xbf16, #tpu.memory_space<vmem>>, vector<128x128xbf16>
    %cst_22 = arith.constant dense<0.000000e+00> : vector<16x128xf32>
    %28 = tpu.matmul %5, %27, %cst_22 {dimension_numbers = #tpu.dot_dimension_numbers<[1], [0], [0], [1], [0, 0, 1, 1], [], []>} : vector<16x128xbf16>, vector<128x128xbf16>, vector<16x128xf32> -> vector<16x128xf32>
    %c0_23 = arith.constant 0 : index
    %c0_24 = arith.constant 0 : index
    %29 = vector.load %arg5[%c0_23, %c0_24] : memref<32x16xbf16, #tpu.memory_space<vmem>>, vector<32x16xbf16>
    %30 = arith.truncf %28 : vector<16x128xf32> to vector<16x128xbf16>
    %cst_25 = arith.constant dense<0.000000e+00> : vector<32x128xf32>
    %31 = tpu.matmul %29, %30, %cst_25 {dimension_numbers = #tpu.dot_dimension_numbers<[1], [0], [0], [1], [0, 0, 1, 1], [], []>} : vector<32x16xbf16>, vector<16x128xbf16>, vector<32x128xf32> -> vector<32x128xf32>
    %c0_26 = arith.constant 0 : index
    %c0_27 = arith.constant 0 : index
    %32 = vector.load %arg9[%c0_26, %c0_27] : memref<32x1xf32, #tpu.memory_space<vmem>>, vector<32x1xf32>
    %33 = vector.broadcast %32 : vector<32x1xf32> to vector<32x128xf32>
    %34 = arith.mulf %31, %33 : vector<32x128xf32>
    %c0_28 = arith.constant 0 : index
    %c0_29 = arith.constant 0 : index
    %35 = vector.load %arg4[%c0_28, %c0_29] : memref<1x128xf32, #tpu.memory_space<vmem>>, vector<1x128xf32>
    %36 = vector.broadcast %35 : vector<1x128xf32> to vector<32x128xf32>
    %37 = arith.addf %34, %36 : vector<32x128xf32>
    %cst_30 = arith.constant 0.000000e+00 : f32
    %38 = vector.broadcast %cst_30 : f32 to vector<32x128xf32>
    %39 = arith.maximumf %37, %38 : vector<32x128xf32>
    %40 = arith.addf %4, %39 : vector<32x128xf32>
    %c0_31 = arith.constant 0 : index
    %c0_32 = arith.constant 0 : index
    %41 = vector.load %arg13[%c0_31, %c0_32] : memref<16x128xf32, #tpu.memory_space<vmem>>, vector<16x128xf32>
    tpu.vector_store %arg13[%c0_31, %c0_32], %26 {strides = array<i32>} : memref<16x128xf32, #tpu.memory_space<vmem>>, vector<16x128xf32>,
    %c0_33 = arith.constant 0 : index
    %c0_34 = arith.constant 0 : index
    %42 = vector.load %arg14[%c0_33, %c0_34] : memref<32x128xf32, #tpu.memory_space<vmem>>, vector<32x128xf32>
    tpu.vector_store %arg14[%c0_33, %c0_34], %40 {strides = array<i32>} : memref<32x128xf32, #tpu.memory_space<vmem>>, vector<32x128xf32>,
    return
  }
  func.func @transform_2(%arg0: i32) -> (i32, i32) {
    %c0_i32 = arith.constant 0 : i32
    %c0_i32_0 = arith.constant 0 : i32
    %c0_i32_1 = arith.constant 0 : i32
    return %c0_i32, %c0_i32_0 : i32, i32
  }
  func.func @transform_3(%arg0: i32) -> (i32, i32) {
    %c0_i32 = arith.constant 0 : i32
    %c0_i32_0 = arith.constant 0 : i32
    %c0_i32_1 = arith.constant 0 : i32
    return %c0_i32, %c0_i32_0 : i32, i32
  }
  func.func @transform_4(%arg0: i32) -> (i32, i32) {
    %c0_i32 = arith.constant 0 : i32
    %c0_i32_0 = arith.constant 0 : i32
    %c0_i32_1 = arith.constant 0 : i32
    return %c0_i32, %c0_i32_0 : i32, i32
  }
  func.func @transform_5(%arg0: i32) -> (i32, i32) {
    %c0_i32 = arith.constant 0 : i32
    %c0_i32_0 = arith.constant 0 : i32
    %c0_i32_1 = arith.constant 0 : i32
    return %c0_i32, %c0_i32_0 : i32, i32
  }
  func.func @transform_6(%arg0: i32) -> (i32, i32) {
    %c0_i32 = arith.constant 0 : i32
    %c0_i32_0 = arith.constant 0 : i32
    %c0_i32_1 = arith.constant 0 : i32
    return %c0_i32, %c0_i32_0 : i32, i32
  }
  func.func @transform_7(%arg0: i32) -> (i32, i32) {
    %c0_i32 = arith.constant 0 : i32
    %c0_i32_0 = arith.constant 0 : i32
    %c0_i32_1 = arith.constant 0 : i32
    return %c0_i32, %c0_i32_0 : i32, i32
  }
  func.func @transform_8(%arg0: i32) -> (i32, i32) {
    %c0_i32 = arith.constant 0 : i32
    %c0_i32_0 = arith.constant 0 : i32
    %c0_i32_1 = arith.constant 0 : i32
    return %c0_i32, %c0_i32_0 : i32, i32
  }
  func.func @transform_9(%arg0: i32) -> (i32, i32) {
    %c0_i32 = arith.constant 0 : i32
    %c0_i32_0 = arith.constant 0 : i32
    %c0_i32_1 = arith.constant 0 : i32
    return %c0_i32, %c0_i32_0 : i32, i32
  }
  func.func @transform_10(%arg0: i32) -> (i32, i32) {
    %c0_i32 = arith.constant 0 : i32
    %c0_i32_0 = arith.constant 0 : i32
    %c0_i32_1 = arith.constant 0 : i32
    return %c0_i32, %c0_i32_0 : i32, i32
  }
  func.func @transform_11(%arg0: i32) -> (i32, i32) {
    %c0_i32 = arith.constant 0 : i32
    %c0_i32_0 = arith.constant 0 : i32
    %c0_i32_1 = arith.constant 0 : i32
    return %c0_i32, %c0_i32_0 : i32, i32
  }
  func.func @transform_12(%arg0: i32) -> (i32, i32) {
    %c0_i32 = arith.constant 0 : i32
    %c0_i32_0 = arith.constant 0 : i32
    %c0_i32_1 = arith.constant 0 : i32
    return %c0_i32, %c0_i32_0 : i32, i32
  }
  func.func @transform_13(%arg0: i32) -> (i32, i32) {
    %c0_i32 = arith.constant 0 : i32
    %c0_i32_0 = arith.constant 0 : i32
    %c0_i32_1 = arith.constant 0 : i32
    return %c0_i32, %c0_i32_0 : i32, i32
  }
}

</mosaic_0001>

<llo_original>
// kernel: tpu_custom_call.1
$region0: #{tpu_custom_call.1}
  #allocation0 [shape = 'u32[]', space=smem, size = 0x4, offset = 0x4, fixed_abs, tag = 'smem constant byte address 0x4 - core index']
  #allocation1 [shape = 'u32[144,128]{1,0:T(1,128)}', space=vmem, size = 0x12000, scoped, tag = 'internal scratch']
  #allocation2 [shape = 's32[2]{0}', space=sflag, size = 0x8, scoped, tag = 'scratch operand']
  #allocation9 [shape = 's32[]', space=sflag, size = 0x4, offset = 0, fixed_abs, tag = 'sflag constant byte address 0x0 - dummy sync flag']
  #allocation10 [shape = 's32[]', space=sflag, size = 0x4, offset = 0, fixed_abs, tag = 'sflag constant byte address 0x0 - dummy sync flag']
  #allocation11 [shape = 'u32[]', space=smem, size = 0x4, offset = 0x44, fixed_abs, tag = 'smem constant byte address 0x44 - assertion arg 0']
  #allocation12 [shape = 'u32[]', space=smem, size = 0x4, offset = 0x48, fixed_abs, tag = 'smem constant byte address 0x48 - assertion arg 1']
  #allocation13 [shape = 's32[]', space=sflag, size = 0x4, offset = 0, fixed_abs, tag = 'sflag constant byte address 0x0 - dummy sync flag']
  #allocation14 [shape = 's32[]', space=sflag, size = 0x4, offset = 0, fixed_abs, tag = 'sflag constant byte address 0x0 - dummy sync flag']
  %s0 = inlined_call_operand.hbm [shape: f32[16,128], index: 0, kind: input, shape index: {}, may-alias: {0,12}]
  %s1 = inlined_call_operand.hbm [shape: f32[32,128], index: 1, kind: input, shape index: {}, may-alias: {1,13}]
  %s2 = inlined_call_operand.vmem [shape: f32[1,128], index: 2, kind: input, shape index: {}]
  %s3 = inlined_call_operand.vmem [shape: f32[1,128], index: 3, kind: input, shape index: {}]
  %s4 = inlined_call_operand.vmem [shape: bf16[32,16], index: 4, kind: input, shape index: {}]
  %s5 = inlined_call_operand.vmem [shape: bf16[16,32], index: 5, kind: input, shape index: {}]
  %s6 = inlined_call_operand.vmem [shape: bf16[16,16], index: 6, kind: input, shape index: {}]
  %s7 = inlined_call_operand.vmem [shape: f32[16,1], index: 7, kind: input, shape index: {}]
  %s8 = inlined_call_operand.vmem [shape: f32[32,1], index: 8, kind: input, shape index: {}]
  %s9 = inlined_call_operand.vmem [shape: bf16[128,128], index: 9, kind: input, shape index: {}]
  %s10 = inlined_call_operand.vmem [shape: bf16[128,128], index: 10, kind: input, shape index: {}]
  %s11 = inlined_call_operand.hbm [shape: bf16[128,128], index: 11, kind: input, shape index: {}]
  %s12 = inlined_call_operand.hbm [shape: f32[16,128], index: 12, kind: output, shape index: {0}, may-alias: {0,12}]
  %s13 = inlined_call_operand.hbm [shape: f32[32,128], index: 13, kind: output, shape index: {1}, may-alias: {1,13}]
  %14 = xla_tuple %s12, %s13
  %s15 = sld [smem:[#allocation0]]
  $region97: #{tpu_custom_call.1} parent=0
    _
  %s17 = ssub.s32 1, %s15
  %s18 = scalar_select 0, %s17, %s15
  $region1: #{tpu_custom_call.1} parent=0
    #allocation3 [shape = 'u8[32768]{0}', space=vmem, size = 0x8000, scoped, tag = 'input window, operand 11, single buffered']
    #allocation4 [shape = 's32[2]{0}', space=sflag, size = 0x8, scoped, tag = 'scoped memory for tpu_custom_call.1']
    #allocation5 [shape = 's32[2]{0}', space=sflag, size = 0x8, scoped, tag = 'scoped memory for tpu_custom_call.1']
    #allocation6 [shape = 'u8[8192]{0}', space=vmem, size = 0x2000, scoped, tag = 'output window, operand 0, single buffered']
    #allocation7 [shape = 'u8[16384]{0}', space=vmem, size = 0x4000, scoped, tag = 'output window, operand 1, single buffered']
    #allocation8 [shape = 's32[1]{0}', space=sflag, size = 0x4, scoped, tag = 'scoped memory for tpu_custom_call.1']
    %19 = vsyncpa [#allocation4], 0
    %20 = vsyncpa [#allocation5], 0
    %21 = vsyncpa [#allocation8], 0
    loop: start=0, step=1, limit=5
    $region2: #{tpu_custom_call.1} parent=1 // loop_pre_header
      _
    $region3: #{tpu_custom_call.1} parent=1 // loop_header
      %s23 = sphi 0, %s27
      %p24 = scmp.ge.s32.totalorder %s23, 5
      %s31 = sphi 0, %s31
      %s33 = sphi 0, %s31
      %s34 = sphi 0, %s33
      %s48 = sphi 0, %s34
      %s52 = sphi 0, %s52
      %s54 = sphi 0, %s52
      %s55 = sphi 0, %s54
      %s69 = sphi 0, %s55
      %s73 = sphi 0, %s73
      %s75 = sphi 0, %s73
      %s76 = sphi 0, %s75
      %s90 = sphi 0, %s76
      %s94 = sphi 0, %s94
      %s96 = sphi 0, %s94
      %s97 = sphi 0, %s96
      %s111 = sphi 0, %s97
      %s115 = sphi 0, %s115
      %s117 = sphi 0, %s115
      %s118 = sphi 0, %s117
      %s132 = sphi 0, %s118
      %s136 = sphi 0, %s136
      %s138 = sphi 0, %s136
      %s139 = sphi 0, %s138
      %s153 = sphi 0, %s139
      %s157 = sphi 0, %s157
      %s159 = sphi 0, %s157
      %s160 = sphi 0, %s159
      %s174 = sphi 0, %s160
      %s178 = sphi 0, %s178
      %s180 = sphi 0, %s178
      %s181 = sphi 0, %s180
      %s195 = sphi 0, %s181
      %s199 = sphi 0, %s199
      %s201 = sphi 0, %s199
      %s202 = sphi 0, %s201
      %s216 = sphi 0, %s202
      %s220 = sphi 0, %s220
      %s222 = sphi 0, %s220
      %s223 = sphi 0, %s222
      %s237 = sphi 0, %s223
      %s241 = sphi 0, %s241
      %s243 = sphi 0, %s241
      %s244 = sphi 0, %s243
      %s258 = sphi 0, %s244
      %s262 = sphi 0, %s262
      %s264 = sphi 0, %s262
      %s265 = sphi 0, %s264
      %s279 = sphi 0, %s265
    $region4: #{tpu_custom_call.1} parent=1 // loop_header_branch
      %26 = sbr.rel (%p24) target = $region8
    $region5: #{tpu_custom_call.1} parent=1 // loop_body
      %s28 = ssub.s32 %s23, 1
      %s29 = ssub.s32 %s23, 2
      %s30 = sadd.s32 %s23, 1
      %s32 = sadd.s32 %s31, 1
      %p35 = scmp.eq.s32.totalorder %s23, 2
      %p36 = scmp.ne.s32.totalorder %s31, %s33
      %p37 = scmp.eq.s32.totalorder %s23, 0
      %p38 = por %p36, %p37
      %p39 = scmp.ne.s32.totalorder %s31, %s33
      %p40 = scmp.eq.s32.totalorder %s28, 2
      %p41 = por %p39, %p40
      %p42 = scmp.ne.s32.totalorder %s33, %s34
      %p43 = scmp.eq.s32.totalorder %s28, 0
      %p44 = por %p42, %p43
      %p45 = scmp.ne.s32.totalorder %s33, %s34
      %p46 = scmp.eq.s32.totalorder %s29, 2
      %p47 = por %p45, %p46
      %p49 = scmp.ne.s32.totalorder %s34, %s48
      %p50 = scmp.eq.s32.totalorder %s29, 0
      %p51 = por %p49, %p50
      %s53 = sadd.s32 %s52, 1
      %p56 = scmp.eq.s32.totalorder %s23, 2
      %p57 = scmp.ne.s32.totalorder %s52, %s54
      %p58 = scmp.eq.s32.totalorder %s23, 0
      %p59 = por %p57, %p58
      %p60 = scmp.ne.s32.totalorder %s52, %s54
      %p61 = scmp.eq.s32.totalorder %s28, 2
      %p62 = por %p60, %p61
      %p63 = scmp.ne.s32.totalorder %s54, %s55
      %p64 = scmp.eq.s32.totalorder %s28, 0
      %p65 = por %p63, %p64
      %p66 = scmp.ne.s32.totalorder %s54, %s55
      %p67 = scmp.eq.s32.totalorder %s29, 2
      %p68 = por %p66, %p67
      %p70 = scmp.ne.s32.totalorder %s55, %s69
      %p71 = scmp.eq.s32.totalorder %s29, 0
      %p72 = por %p70, %p71
      %s74 = sadd.s32 %s73, 1
      %p77 = scmp.eq.s32.totalorder %s23, 2
      %p78 = scmp.ne.s32.totalorder %s73, %s75
      %p79 = scmp.eq.s32.totalorder %s23, 0
      %p80 = por %p78, %p79
      %p81 = scmp.ne.s32.totalorder %s73, %s75
      %p82 = scmp.eq.s32.totalorder %s28, 2
      %p83 = por %p81, %p82
      %p84 = scmp.ne.s32.totalorder %s75, %s76
      %p85 = scmp.eq.s32.totalorder %s28, 0
      %p86 = por %p84, %p85
      %p87 = scmp.ne.s32.totalorder %s75, %s76
      %p88 = scmp.eq.s32.totalorder %s29, 2
      %p89 = por %p87, %p88
      %p91 = scmp.ne.s32.totalorder %s76, %s90
      %p92 = scmp.eq.s32.totalorder %s29, 0
      %p93 = por %p91, %p92
      %s95 = sadd.s32 %s94, 1
      %p98 = scmp.eq.s32.totalorder %s23, 2
      %p99 = scmp.ne.s32.totalorder %s94, %s96
      %p100 = scmp.eq.s32.totalorder %s23, 0
      %p101 = por %p99, %p100
      %p102 = scmp.ne.s32.totalorder %s94, %s96
      %p103 = scmp.eq.s32.totalorder %s28, 2
      %p104 = por %p102, %p103
      %p105 = scmp.ne.s32.totalorder %s96, %s97
      %p106 = scmp.eq.s32.totalorder %s28, 0
      %p107 = por %p105, %p106
      %p108 = scmp.ne.s32.totalorder %s96, %s97
      %p109 = scmp.eq.s32.totalorder %s29, 2
      %p110 = por %p108, %p109
      %p112 = scmp.ne.s32.totalorder %s97, %s111
      %p113 = scmp.eq.s32.totalorder %s29, 0
      %p114 = por %p112, %p113
      %s116 = sadd.s32 %s115, 1
      %p119 = scmp.eq.s32.totalorder %s23, 2
      %p120 = scmp.ne.s32.totalorder %s115, %s117
      %p121 = scmp.eq.s32.totalorder %s23, 0
      %p122 = por %p120, %p121
      %p123 = scmp.ne.s32.totalorder %s115, %s117
      %p124 = scmp.eq.s32.totalorder %s28, 2
      %p125 = por %p123, %p124
      %p126 = scmp.ne.s32.totalorder %s117, %s118
      %p127 = scmp.eq.s32.totalorder %s28, 0
      %p128 = por %p126, %p127
      %p129 = scmp.ne.s32.totalorder %s117, %s118
      %p130 = scmp.eq.s32.totalorder %s29, 2
      %p131 = por %p129, %p130
      %p133 = scmp.ne.s32.totalorder %s118, %s132
      %p134 = scmp.eq.s32.totalorder %s29, 0
      %p135 = por %p133, %p134
      %s137 = sadd.s32 %s136, 1
      %p140 = scmp.eq.s32.totalorder %s23, 2
      %p141 = scmp.ne.s32.totalorder %s136, %s138
      %p142 = scmp.eq.s32.totalorder %s23, 0
      %p143 = por %p141, %p142
      %p144 = scmp.ne.s32.totalorder %s136, %s138
      %p145 = scmp.eq.s32.totalorder %s28, 2
      %p146 = por %p144, %p145
      %p147 = scmp.ne.s32.totalorder %s138, %s139
      %p148 = scmp.eq.s32.totalorder %s28, 0
      %p149 = por %p147, %p148
      %p150 = scmp.ne.s32.totalorder %s138, %s139
      %p151 = scmp.eq.s32.totalorder %s29, 2
      %p152 = por %p150, %p151
      %p154 = scmp.ne.s32.totalorder %s139, %s153
      %p155 = scmp.eq.s32.totalorder %s29, 0
      %p156 = por %p154, %p155
      %s158 = sadd.s32 %s157, 1
      %p161 = scmp.eq.s32.totalorder %s23, 2
      %p162 = scmp.ne.s32.totalorder %s157, %s159
      %p163 = scmp.eq.s32.totalorder %s23, 0
      %p164 = por %p162, %p163
      %p165 = scmp.ne.s32.totalorder %s157, %s159
      %p166 = scmp.eq.s32.totalorder %s28, 2
      %p167 = por %p165, %p166
      %p168 = scmp.ne.s32.totalorder %s159, %s160
      %p169 = scmp.eq.s32.totalorder %s28, 0
      %p170 = por %p168, %p169
      %p171 = scmp.ne.s32.totalorder %s159, %s160
      %p172 = scmp.eq.s32.totalorder %s29, 2
      %p173 = por %p171, %p172
      %p175 = scmp.ne.s32.totalorder %s160, %s174
      %p176 = scmp.eq.s32.totalorder %s29, 0
      %p177 = por %p175, %p176
      %s179 = sadd.s32 %s178, 1
      %p182 = scmp.eq.s32.totalorder %s23, 2
      %p183 = scmp.ne.s32.totalorder %s178, %s180
      %p184 = scmp.eq.s32.totalorder %s23, 0
      %p185 = por %p183, %p184
      %p186 = scmp.ne.s32.totalorder %s178, %s180
      %p187 = scmp.eq.s32.totalorder %s28, 2
      %p188 = por %p186, %p187
      %p189 = scmp.ne.s32.totalorder %s180, %s181
      %p190 = scmp.eq.s32.totalorder %s28, 0
      %p191 = por %p189, %p190
      %p192 = scmp.ne.s32.totalorder %s180, %s181
      %p193 = scmp.eq.s32.totalorder %s29, 2
      %p194 = por %p192, %p193
      %p196 = scmp.ne.s32.totalorder %s181, %s195
      %p197 = scmp.eq.s32.totalorder %s29, 0
      %p198 = por %p196, %p197
      %s200 = sadd.s32 %s199, 1
      %p203 = scmp.eq.s32.totalorder %s23, 2
      %p204 = scmp.ne.s32.totalorder %s199, %s201
      %p205 = scmp.eq.s32.totalorder %s23, 0
      %p206 = por %p204, %p205
      %p207 = scmp.ne.s32.totalorder %s199, %s201
      %p208 = scmp.eq.s32.totalorder %s28, 2
      %p209 = por %p207, %p208
      %p210 = scmp.ne.s32.totalorder %s201, %s202
      %p211 = scmp.eq.s32.totalorder %s28, 0
      %p212 = por %p210, %p211
      %p213 = scmp.ne.s32.totalorder %s201, %s202
      %p214 = scmp.eq.s32.totalorder %s29, 2
      %p215 = por %p213, %p214
      %p217 = scmp.ne.s32.totalorder %s202, %s216
      %p218 = scmp.eq.s32.totalorder %s29, 0
      %p219 = por %p217, %p218
      %s221 = sadd.s32 %s220, 1
      %p224 = scmp.eq.s32.totalorder %s23, 2
      %p225 = scmp.ne.s32.totalorder %s220, %s222
      %p226 = scmp.eq.s32.totalorder %s23, 0
      %p227 = por %p225, %p226
      %p228 = scmp.ne.s32.totalorder %s220, %s222
      %p229 = scmp.eq.s32.totalorder %s28, 2
      %p230 = por %p228, %p229
      %p231 = scmp.ne.s32.totalorder %s222, %s223
      %p232 = scmp.eq.s32.totalorder %s28, 0
      %p233 = por %p231, %p232
      %p234 = scmp.ne.s32.totalorder %s222, %s223
      %p235 = scmp.eq.s32.totalorder %s29, 2
      %p236 = por %p234, %p235
      %p238 = scmp.ne.s32.totalorder %s223, %s237
      %p239 = scmp.eq.s32.totalorder %s29, 0
      %p240 = por %p238, %p239
      %s242 = sadd.s32 %s241, 1
      %p245 = scmp.eq.s32.totalorder %s23, 2
      %p246 = scmp.ne.s32.totalorder %s241, %s243
      %p247 = scmp.eq.s32.totalorder %s23, 0
      %p248 = por %p246, %p247
      %p249 = scmp.ne.s32.totalorder %s241, %s243
      %p250 = scmp.eq.s32.totalorder %s28, 2
      %p251 = por %p249, %p250
      %p252 = scmp.ne.s32.totalorder %s243, %s244
      %p253 = scmp.eq.s32.totalorder %s28, 0
      %p254 = por %p252, %p253
      %p255 = scmp.ne.s32.totalorder %s243, %s244
      %p256 = scmp.eq.s32.totalorder %s29, 2
      %p257 = por %p255, %p256
      %p259 = scmp.ne.s32.totalorder %s244, %s258
      %p260 = scmp.eq.s32.totalorder %s29, 0
      %p261 = por %p259, %p260
      %s263 = sadd.s32 %s262, 1
      %p266 = scmp.eq.s32.totalorder %s23, 2
      %p267 = scmp.ne.s32.totalorder %s262, %s264
      %p268 = scmp.eq.s32.totalorder %s23, 0
      %p269 = por %p267, %p268
      %p270 = scmp.ne.s32.totalorder %s262, %s264
      %p271 = scmp.eq.s32.totalorder %s28, 2
      %p272 = por %p270, %p271
      %p273 = scmp.ne.s32.totalorder %s264, %s265
      %p274 = scmp.eq.s32.totalorder %s28, 0
      %p275 = por %p273, %p274
      %p276 = scmp.ne.s32.totalorder %s264, %s265
      %p277 = scmp.eq.s32.totalorder %s29, 2
      %p278 = por %p276, %p277
      %p280 = scmp.ne.s32.totalorder %s265, %s279
      %p281 = scmp.eq.s32.totalorder %s29, 0
      %p282 = por %p280, %p281
      %p283 = scmp.le.s32.totalorder 1, %s23
      %p284 = scmp.lt.s32.totalorder %s23, 4
      %p285 = pnand %p283, %p284
      %p286 = pneg %p285
      // Predicated region
      $region9: #{tpu_custom_call.1} parent=5 // pred_check
        _
      $region10: #{tpu_custom_call.1} parent=5 // pred_check_branch
        %288 = sbr.rel (%p285) target = $region12
      $region11: #{tpu_custom_call.1} parent=5 // pred_region
        %s289 = ssub.s32 %s23, 1
        // Predicated region
        $region13: #{tpu_custom_call.1} parent=11 // pred_check
          %p290 = pneg %p44
        $region14: #{tpu_custom_call.1} parent=11 // pred_check_branch
          %292 = sbr.rel (%p290) target = $region16
        $region15: #{tpu_custom_call.1} parent=11 // pred_region
          _
        $region16: #{tpu_custom_call.1} parent=11 // pred_fallthru
          _
        // Predicated region
        $region17: #{tpu_custom_call.1} parent=11 // pred_check
          %p293 = pneg %p65
        $region18: #{tpu_custom_call.1} parent=11 // pred_check_branch
          %295 = sbr.rel (%p293) target = $region20
        $region19: #{tpu_custom_call.1} parent=11 // pred_region
          _
        $region20: #{tpu_custom_call.1} parent=11 // pred_fallthru
          _
        // Predicated region
        $region21: #{tpu_custom_call.1} parent=11 // pred_check
          %p296 = pneg %p86
        $region22: #{tpu_custom_call.1} parent=11 // pred_check_branch
          %298 = sbr.rel (%p296) target = $region24
        $region23: #{tpu_custom_call.1} parent=11 // pred_region
          _
        $region24: #{tpu_custom_call.1} parent=11 // pred_fallthru
          _
        // Predicated region
        $region25: #{tpu_custom_call.1} parent=11 // pred_check
          %p299 = pneg %p107
        $region26: #{tpu_custom_call.1} parent=11 // pred_check_branch
          %301 = sbr.rel (%p299) target = $region28
        $region27: #{tpu_custom_call.1} parent=11 // pred_region
          _
        $region28: #{tpu_custom_call.1} parent=11 // pred_fallthru
          _
        // Predicated region
        $region29: #{tpu_custom_call.1} parent=11 // pred_check
          %p302 = pneg %p128
        $region30: #{tpu_custom_call.1} parent=11 // pred_check_branch
          %304 = sbr.rel (%p302) target = $region32
        $region31: #{tpu_custom_call.1} parent=11 // pred_region
          _
        $region32: #{tpu_custom_call.1} parent=11 // pred_fallthru
          _
        // Predicated region
        $region33: #{tpu_custom_call.1} parent=11 // pred_check
          %p305 = pneg %p149
        $region34: #{tpu_custom_call.1} parent=11 // pred_check_branch
          %307 = sbr.rel (%p305) target = $region36
        $region35: #{tpu_custom_call.1} parent=11 // pred_region
          _
        $region36: #{tpu_custom_call.1} parent=11 // pred_fallthru
          _
        // Predicated region
        $region37: #{tpu_custom_call.1} parent=11 // pred_check
          %p308 = pneg %p170
        $region38: #{tpu_custom_call.1} parent=11 // pred_check_branch
          %310 = sbr.rel (%p308) target = $region40
        $region39: #{tpu_custom_call.1} parent=11 // pred_region
          _
        $region40: #{tpu_custom_call.1} parent=11 // pred_fallthru
          _
        // Predicated region
        $region41: #{tpu_custom_call.1} parent=11 // pred_check
          %p311 = pneg %p191
        $region42: #{tpu_custom_call.1} parent=11 // pred_check_branch
          %313 = sbr.rel (%p311) target = $region44
        $region43: #{tpu_custom_call.1} parent=11 // pred_region
          _
        $region44: #{tpu_custom_call.1} parent=11 // pred_fallthru
          _
        // Predicated region
        $region45: #{tpu_custom_call.1} parent=11 // pred_check
          %p314 = pneg %p212
        $region46: #{tpu_custom_call.1} parent=11 // pred_check_branch
          %316 = sbr.rel (%p314) target = $region48
        $region47: #{tpu_custom_call.1} parent=11 // pred_region
          _
        $region48: #{tpu_custom_call.1} parent=11 // pred_fallthru
          _
        // Predicated region
        $region49: #{tpu_custom_call.1} parent=11 // pred_check
          %p317 = pneg %p233
        $region50: #{tpu_custom_call.1} parent=11 // pred_check_branch
          %319 = sbr.rel (%p317) target = $region52
        $region51: #{tpu_custom_call.1} parent=11 // pred_region
          %s321 = ssub.s32 1024, 1024
          %322 = vsyncadd [#allocation4], %s321
          %s323 = sshll.u32 [#allocation3], 4
          %s324 = int_to_ptr.vmem [resolvable:$true] %s323
          %329 = dma.hbm_to_vmem [thread:$0]  %s11, 1024, %s324, [#allocation4], 64, 64, 4
        $region52: #{tpu_custom_call.1} parent=11 // pred_fallthru
          _
      $region12: #{tpu_custom_call.1} parent=5 // pred_fallthru
        _
      %p330 = scmp.lt.s32.totalorder %s23, 3
      // Predicated region
      $region53: #{tpu_custom_call.1} parent=5 // pred_check
        %p331 = pneg %p330
      $region54: #{tpu_custom_call.1} parent=5 // pred_check_branch
        %333 = sbr.rel (%p331) target = $region56
      $region55: #{tpu_custom_call.1} parent=5 // pred_region
        _
      $region56: #{tpu_custom_call.1} parent=5 // pred_fallthru
        _
      %p334 = scmp.le.s32.totalorder 1, %s23
      %p335 = scmp.lt.s32.totalorder %s23, 4
      %p336 = pnand %p334, %p335
      %p337 = pneg %p336
      // Predicated region
      $region57: #{tpu_custom_call.1} parent=5 // pred_check
        _
      $region58: #{tpu_custom_call.1} parent=5 // pred_check_branch
        %339 = sbr.rel (%p336) target = $region60
      $region59: #{tpu_custom_call.1} parent=5 // pred_region
        %s340 = ssub.s32 %s23, 1
        // Predicated region
        $region61: #{tpu_custom_call.1} parent=59 // pred_check
          %p341 = pneg %p233
        $region62: #{tpu_custom_call.1} parent=59 // pred_check_branch
          %343 = sbr.rel (%p341) target = $region64
        $region63: #{tpu_custom_call.1} parent=59 // pred_region
          %344 = dma.done [#allocation4], 1024
        $region64: #{tpu_custom_call.1} parent=59 // pred_fallthru
          _
        %p345 = pneg %p44
        %p346 = pneg %p41
        %p347 = pneg %p65
        %p348 = pneg %p62
        %p349 = pneg %p86
        %p350 = pneg %p83
        %p351 = pneg %p107
        %p352 = pneg %p104
        %p353 = pneg %p128
        %p354 = pneg %p125
        %p355 = pneg %p149
        %p356 = pneg %p146
        %p357 = pneg %p170
        %p358 = pneg %p167
        %p359 = pneg %p191
        %p360 = pneg %p188
        %p361 = pneg %p212
        %p362 = pneg %p209
        %p363 = pneg %p233
        %p364 = pneg %p230
        %p365 = pneg %p254
        %p366 = pneg %p251
        %p367 = pneg %p275
        %p368 = pneg %p272
        %p370 = scmp.eq.s32.totalorder %s28, 0
        // Predicated region
        $region65: #{tpu_custom_call.1} parent=59 // pred_check
          %p371 = pneg %p370
        $region66: #{tpu_custom_call.1} parent=59 // pred_check_branch
          %373 = sbr.rel (%p371) target = $region68
        $region67: #{tpu_custom_call.1} parent=59 // pred_region
          // Predicated region
          $region69: #{tpu_custom_call.1} parent=67 // pred_check
            _
          $region70: #{tpu_custom_call.1} parent=67 // pred_check_branch
            %375 = sbr.rel target = $region72
          $region71: #{tpu_custom_call.1} parent=67 // pred_region
            %376 = sst [smem:[#allocation11]] [#allocation10]
            %377 = sst [smem:[#allocation12]] [#allocation9]
          $region72: #{tpu_custom_call.1} parent=67 // pred_fallthru
            _
          %379 = shalt.err (0)
          %s381 = sshll.u32 [#allocation6], 4
          %s382 = int_to_ptr.vmem [resolvable:$true] %s381
          %384 = dma.hbm_to_vmem [thread:$0]  %s0, 256, %s382, [#allocation2]
          %s385 = scalar_lea.sflag [#allocation2], 1
          // Predicated region
          $region73: #{tpu_custom_call.1} parent=67 // pred_check
            _
          $region74: #{tpu_custom_call.1} parent=67 // pred_check_branch
            %387 = sbr.rel target = $region76
          $region75: #{tpu_custom_call.1} parent=67 // pred_region
            %388 = sst [smem:[#allocation11]] [#allocation14]
            %389 = sst [smem:[#allocation12]] [#allocation13]
          $region76: #{tpu_custom_call.1} parent=67 // pred_fallthru
            _
          %391 = shalt.err (0)
          %s393 = sshll.u32 [#allocation7], 4
          %s394 = int_to_ptr.vmem [resolvable:$true] %s393
          %396 = dma.hbm_to_vmem [thread:$0]  %s1, 512, %s394, %s385
          %s397 = smul.u32 16, 1
          %s398 = sshll.u32 %s397, 4
          %399 = dma.done [#allocation2], %s398
          %s400 = smul.u32 32, 1
          %s401 = sshll.u32 %s400, 4
          %402 = dma.done %s385, %s401
        $region68: #{tpu_custom_call.1} parent=59 // pred_fallthru
          _
        %v403 = vld [vmem:[#allocation6] sm:$0xff]
        %v404 = vld [vmem:[#allocation6 + $0x8] sm:$0xff]
        %v405 = vld [vmem:[#allocation7] sm:$0xff]
        %v406 = vld [vmem:[#allocation7 + $0x8] sm:$0xff]
        %v407 = vld [vmem:[#allocation7 + $0x10] sm:$0xff]
        %v408 = vld [vmem:[#allocation7 + $0x18] sm:$0xff]
        %v409 = vpack.c.bf16 %v404, %v403
        %v410 = vpack.c.bf16 %v406, %v405
        %v411 = vpack.c.bf16 %v408, %v407
        %v412 = vld [vmem:[%s10] sm:$0xf]
        %v413 = vld [vmem:[%s10 + $0x4] sm:$0xf]
        %v414 = vld [vmem:[%s10 + $0x8] sm:$0xf]
        %v415 = vld [vmem:[%s10 + $0xc] sm:$0xf]
        %v416 = vld [vmem:[%s10 + $0x10] sm:$0xf]
        %v417 = vld [vmem:[%s10 + $0x14] sm:$0xf]
        %v418 = vld [vmem:[%s10 + $0x18] sm:$0xf]
        %v419 = vld [vmem:[%s10 + $0x1c] sm:$0xf]
        %v420 = vld [vmem:[%s10 + $0x20] sm:$0xf]
        %v421 = vld [vmem:[%s10 + $0x24] sm:$0xf]
        %v422 = vld [vmem:[%s10 + $0x28] sm:$0xf]
        %v423 = vld [vmem:[%s10 + $0x2c] sm:$0xf]
        %v424 = vld [vmem:[%s10 + $0x30] sm:$0xf]
        %v425 = vld [vmem:[%s10 + $0x34] sm:$0xf]
        %v426 = vld [vmem:[%s10 + $0x38] sm:$0xf]
        %v427 = vld [vmem:[%s10 + $0x3c] sm:$0xf]
        %v444 = vunpack.c.l.b16 %v412
        %v445 = vunpack.c.l.b16 %v413
        %v446 = vunpack.c.l.b16 %v414
        %v447 = vunpack.c.l.b16 %v415
        %v448 = vunpack.c.l.b16 %v416
        %v449 = vunpack.c.l.b16 %v417
        %v450 = vunpack.c.l.b16 %v418
        %v451 = vunpack.c.l.b16 %v419
        %v452 = vunpack.c.l.b16 %v420
        %v453 = vunpack.c.l.b16 %v421
        %v454 = vunpack.c.l.b16 %v422
        %v455 = vunpack.c.l.b16 %v423
        %v456 = vunpack.c.l.b16 %v424
        %v457 = vunpack.c.l.b16 %v425
        %v458 = vunpack.c.l.b16 %v426
        %v459 = vunpack.c.l.b16 %v427
        %v460 = vpack.c.b16 %v445, %v444
        %v461 = vpack.c.b16 %v447, %v446
        %v462 = vpack.c.b16 %v449, %v448
        %v463 = vpack.c.b16 %v451, %v450
        %v464 = vpack.c.b16 %v453, %v452
        %v465 = vpack.c.b16 %v455, %v454
        %v466 = vpack.c.b16 %v457, %v456
        %v467 = vpack.c.b16 %v459, %v458
        %476 = vmatprep.subr.bf16.mxu0 0
        %477 = vmatpush1.bf16.msra.mxu0 %v460
        %478 = vmatprep.subr.bf16.mxu0 0
        %479 = vmatpush1.bf16.msra.mxu0 %v461
        %480 = vmatprep.subr.bf16.mxu0 0
        %481 = vmatpush1.bf16.msra.mxu0 %v462
        %482 = vmatprep.subr.bf16.mxu0 0
        %483 = vmatpush1.bf16.msra.mxu0 %v463
        %484 = vmatprep.subr.bf16.mxu0 0
        %485 = vmatpush1.bf16.msra.mxu0 %v464
        %486 = vmatprep.subr.bf16.mxu0 0
        %487 = vmatpush1.bf16.msra.mxu0 %v465
        %488 = vmatprep.subr.bf16.mxu0 0
        %489 = vmatpush1.bf16.msra.mxu0 %v466
        %490 = vmatprep.subr.bf16.mxu0 0
        %491 = vmatpush1.bf16.msra.mxu0 %v467
        %492 = vmatprep.subr.bf16.mxu0 0
        %493 = vmatpush1.bf16.msra.mxu0 0
        %494 = vmatprep.subr.bf16.mxu0 0
        %495 = vmatpush1.bf16.msra.mxu0 0
        %496 = vmatprep.subr.bf16.mxu0 0
        %497 = vmatpush1.bf16.msra.mxu0 0
        %498 = vmatprep.subr.bf16.mxu0 0
        %499 = vmatpush1.bf16.msra.mxu0 0
        %500 = vmatprep.subr.bf16.mxu0 0
        %501 = vmatpush1.bf16.msra.mxu0 0
        %502 = vmatprep.subr.bf16.mxu0 0
        %503 = vmatpush1.bf16.msra.mxu0 0
        %504 = vmatprep.subr.bf16.mxu0 0
        %505 = vmatpush1.bf16.msra.mxu0 0
        %506 = vmatprep.subr.bf16.mxu0 0
        %507 = vmatpush1.bf16.msra.mxu0 0
        %508 = vmatprep.mubr.bf16.mxu0 0
        %509 = vmatmul.mubr.bf16.gmra.mrb[0].mxu0 %v410
        %v510 = vpop.f32.mrb[0].mxu0
        %v511 = vadd.f32 0.0, %v510
        %v512 = vpop.f32.mrb[0].mxu0
        %v513 = vpop.f32.mrb[0].mxu0
        %v514 = vadd.f32 0.0, %v513
        %v515 = vpop.f32.mrb[0].mxu0
        %516 = vmatprep.mubr.bf16.mxu0 0
        %517 = vmatmul.mubr.bf16.gmra.mrb[0].mxu0 %v411
        %v518 = vpop.f32.mrb[0].mxu0
        %v519 = vadd.f32 0.0, %v518
        %v520 = vpop.f32.mrb[0].mxu0
        %v521 = vpop.f32.mrb[0].mxu0
        %v522 = vadd.f32 0.0, %v521
        %v523 = vpop.f32.mrb[0].mxu0
        %524 = vdwg.mxu0
        %v525 = vld [vmem:[%s5] sm:$0xf]
        %v526 = vld [vmem:[%s5 + $0x4] sm:$0xf]
        %v527 = vpack.c.bf16 %v514, %v511
        %v528 = vpack.c.bf16 %v522, %v519
        %v529 = vld [vmem:[#allocation3] sm:$0xf]
        %v530 = vld [vmem:[#allocation3 + $0x4] sm:$0xf]
        %v531 = vld [vmem:[#allocation3 + $0x8] sm:$0xf]
        %v532 = vld [vmem:[#allocation3 + $0xc] sm:$0xf]
        %v533 = vld [vmem:[#allocation3 + $0x10] sm:$0xf]
        %v534 = vld [vmem:[#allocation3 + $0x14] sm:$0xf]
        %v535 = vld [vmem:[#allocation3 + $0x18] sm:$0xf]
        %v536 = vld [vmem:[#allocation3 + $0x1c] sm:$0xf]
        %v537 = vld [vmem:[#allocation3 + $0x20] sm:$0xf]
        %v538 = vld [vmem:[#allocation3 + $0x24] sm:$0xf]
        %v539 = vld [vmem:[#allocation3 + $0x28] sm:$0xf]
        %v540 = vld [vmem:[#allocation3 + $0x2c] sm:$0xf]
        %v541 = vld [vmem:[#allocation3 + $0x30] sm:$0xf]
        %v542 = vld [vmem:[#allocation3 + $0x34] sm:$0xf]
        %v543 = vld [vmem:[#allocation3 + $0x38] sm:$0xf]
        %v544 = vld [vmem:[#allocation3 + $0x3c] sm:$0xf]
        %v561 = vunpack.c.l.b16 %v529
        %v562 = vunpack.c.l.b16 %v530
        %v563 = vunpack.c.l.b16 %v531
        %v564 = vunpack.c.l.b16 %v532
        %v565 = vunpack.c.l.b16 %v533
        %v566 = vunpack.c.l.b16 %v534
        %v567 = vunpack.c.l.b16 %v535
        %v568 = vunpack.c.l.b16 %v536
        %v569 = vunpack.c.l.b16 %v537
        %v570 = vunpack.c.l.b16 %v538
        %v571 = vunpack.c.l.b16 %v539
        %v572 = vunpack.c.l.b16 %v540
        %v573 = vunpack.c.l.b16 %v541
        %v574 = vunpack.c.l.b16 %v542
        %v575 = vunpack.c.l.b16 %v543
        %v576 = vunpack.c.l.b16 %v544
        %v577 = vpack.c.b16 %v562, %v561
        %v578 = vpack.c.b16 %v564, %v563
        %v579 = vpack.c.b16 %v566, %v565
        %v580 = vpack.c.b16 %v568, %v567
        %v581 = vpack.c.b16 %v570, %v569
        %v582 = vpack.c.b16 %v572, %v571
        %v583 = vpack.c.b16 %v574, %v573
        %v584 = vpack.c.b16 %v576, %v575
        %593 = vmatprep.subr.bf16.mxu0 0
        %594 = vmatpush1.bf16.msra.mxu0 %v577
        %595 = vmatprep.subr.bf16.mxu0 0
        %596 = vmatpush1.bf16.msra.mxu0 %v578
        %597 = vmatprep.subr.bf16.mxu0 0
        %598 = vmatpush1.bf16.msra.mxu0 %v579
        %599 = vmatprep.subr.bf16.mxu0 0
        %600 = vmatpush1.bf16.msra.mxu0 %v580
        %601 = vmatprep.subr.bf16.mxu0 0
        %602 = vmatpush1.bf16.msra.mxu0 %v581
        %603 = vmatprep.subr.bf16.mxu0 0
        %604 = vmatpush1.bf16.msra.mxu0 %v582
        %605 = vmatprep.subr.bf16.mxu0 0
        %606 = vmatpush1.bf16.msra.mxu0 %v583
        %607 = vmatprep.subr.bf16.mxu0 0
        %608 = vmatpush1.bf16.msra.mxu0 %v584
        %609 = vmatprep.subr.bf16.mxu0 0
        %610 = vmatpush1.bf16.msra.mxu0 0
        %611 = vmatprep.subr.bf16.mxu0 0
        %612 = vmatpush1.bf16.msra.mxu0 0
        %613 = vmatprep.subr.bf16.mxu0 0
        %614 = vmatpush1.bf16.msra.mxu0 0
        %615 = vmatprep.subr.bf16.mxu0 0
        %616 = vmatpush1.bf16.msra.mxu0 0
        %617 = vmatprep.subr.bf16.mxu0 0
        %618 = vmatpush1.bf16.msra.mxu0 0
        %619 = vmatprep.subr.bf16.mxu0 0
        %620 = vmatpush1.bf16.msra.mxu0 0
        %621 = vmatprep.subr.bf16.mxu0 0
        %622 = vmatpush1.bf16.msra.mxu0 0
        %623 = vmatprep.subr.bf16.mxu0 0
        %624 = vmatpush1.bf16.msra.mxu0 0
        %625 = vmatprep.mubr.bf16.mxu0 0
        %626 = vmatmul.mubr.bf16.gmra.mrb[0].mxu0 %v409
        %v627 = vpop.f32.mrb[0].mxu0
        %v628 = vadd.f32 0.0, %v627
        %v629 = vpop.f32.mrb[0].mxu0
        %v630 = vpop.f32.mrb[0].mxu0
        %v631 = vadd.f32 0.0, %v630
        %v632 = vpop.f32.mrb[0].mxu0
        %633 = vdwg.mxu0
        %v634 = vld [vmem:[%s6] sm:$0xf]
        %v635 = vld [vmem:[%s6 + $0x4] sm:$0xf]
        %v636 = vpack.c.bf16 %v631, %v628
        %v639 = vunpack.c.l.b16 %v634
        %v640 = vunpack.c.l.b16 %v635
        %v641 = vpack.c.b16 %v640, %v639
        %vm642 = vcmask 130048
        %v644 = vsel %vm642, %v641, 0
        %646 = vmatprep.subr.bf16.mxu0 0
        %647 = vmatpush1.bf16.msra.mxu0 %v636
        %648 = vmatprep.subr.bf16.mxu0 0
        %649 = vmatpush1.bf16.msra.mxu0 0
        %650 = vmatprep.subr.bf16.mxu0 0
        %651 = vmatpush1.bf16.msra.mxu0 0
        %652 = vmatprep.subr.bf16.mxu0 0
        %653 = vmatpush1.bf16.msra.mxu0 0
        %654 = vmatprep.subr.bf16.mxu0 0
        %655 = vmatpush1.bf16.msra.mxu0 0
        %656 = vmatprep.subr.bf16.mxu0 0
        %657 = vmatpush1.bf16.msra.mxu0 0
        %658 = vmatprep.subr.bf16.mxu0 0
        %659 = vmatpush1.bf16.msra.mxu0 0
        %660 = vmatprep.subr.bf16.mxu0 0
        %661 = vmatpush1.bf16.msra.mxu0 0
        %662 = vmatprep.subr.bf16.mxu0 0
        %663 = vmatpush1.bf16.msra.mxu0 0
        %664 = vmatprep.subr.bf16.mxu0 0
        %665 = vmatpush1.bf16.msra.mxu0 0
        %666 = vmatprep.subr.bf16.mxu0 0
        %667 = vmatpush1.bf16.msra.mxu0 0
        %668 = vmatprep.subr.bf16.mxu0 0
        %669 = vmatpush1.bf16.msra.mxu0 0
        %670 = vmatprep.subr.bf16.mxu0 0
        %671 = vmatpush1.bf16.msra.mxu0 0
        %672 = vmatprep.subr.bf16.mxu0 0
        %673 = vmatpush1.bf16.msra.mxu0 0
        %674 = vmatprep.subr.bf16.mxu0 0
        %675 = vmatpush1.bf16.msra.mxu0 0
        %676 = vmatprep.subr.bf16.mxu0 0
        %677 = vmatpush1.bf16.msra.mxu0 0
        %678 = vmatprep.mubr.bf16.mxu0 0
        %679 = vmatmul.mubr.bf16.gmra.mrb[0].mxu0 %v644
        %v680 = vpop.f32.mrb[0].mxu0
        %v681 = vadd.f32 0.0, %v680
        %v682 = vpop.f32.mrb[0].mxu0
        %v683 = vpop.f32.mrb[0].mxu0
        %v684 = vadd.f32 0.0, %v683
        %v685 = vpop.f32.mrb[0].mxu0
        %686 = vdwg.mxu0
        %v689 = vunpack.c.l.b16 %v525
        %v690 = vunpack.c.l.b16 %v526
        %v691 = vpack.c.b16 %v690, %v689
        %vm692 = vcmask 261120
        %v694 = vsel %vm692, %v691, 0
        %696 = vmatprep.subr.bf16.mxu0 0
        %697 = vmatpush1.bf16.msra.mxu0 %v527
        %698 = vmatprep.subr.bf16.mxu0 0
        %699 = vmatpush1.bf16.msra.mxu0 %v528
        %700 = vmatprep.subr.bf16.mxu0 0
        %701 = vmatpush1.bf16.msra.mxu0 0
        %702 = vmatprep.subr.bf16.mxu0 0
        %703 = vmatpush1.bf16.msra.mxu0 0
        %704 = vmatprep.subr.bf16.mxu0 0
        %705 = vmatpush1.bf16.msra.mxu0 0
        %706 = vmatprep.subr.bf16.mxu0 0
        %707 = vmatpush1.bf16.msra.mxu0 0
        %708 = vmatprep.subr.bf16.mxu0 0
        %709 = vmatpush1.bf16.msra.mxu0 0
        %710 = vmatprep.subr.bf16.mxu0 0
        %711 = vmatpush1.bf16.msra.mxu0 0
        %712 = vmatprep.subr.bf16.mxu0 0
        %713 = vmatpush1.bf16.msra.mxu0 0
        %714 = vmatprep.subr.bf16.mxu0 0
        %715 = vmatpush1.bf16.msra.mxu0 0
        %716 = vmatprep.subr.bf16.mxu0 0
        %717 = vmatpush1.bf16.msra.mxu0 0
        %718 = vmatprep.subr.bf16.mxu0 0
        %719 = vmatpush1.bf16.msra.mxu0 0
        %720 = vmatprep.subr.bf16.mxu0 0
        %721 = vmatpush1.bf16.msra.mxu0 0
        %722 = vmatprep.subr.bf16.mxu0 0
        %723 = vmatpush1.bf16.msra.mxu0 0
        %724 = vmatprep.subr.bf16.mxu0 0
        %725 = vmatpush1.bf16.msra.mxu0 0
        %726 = vmatprep.subr.bf16.mxu0 0
        %727 = vmatpush1.bf16.msra.mxu0 0
        %728 = vmatprep.mubr.bf16.mxu0 0
        %729 = vmatmul.mubr.bf16.gmra.mrb[0].mxu0 %v694
        %v730 = vpop.f32.mrb[0].mxu0
        %v731 = vadd.f32 %v681, %v730
        %v732 = vpop.f32.mrb[0].mxu0
        %v733 = vpop.f32.mrb[0].mxu0
        %v734 = vadd.f32 %v684, %v733
        %v735 = vpop.f32.mrb[0].mxu0
        %736 = vdwg.mxu0
        %v737 = vld [vmem:[%s7] sm:$0xff]
        %v738 = vld [vmem:[%s7 + $0x8] sm:$0xff]
        %740 = vset.pattern.permute.xlu0 0
        %741 = vperm.xlu0 %740, %v737
        %v742 = vpop.permute.xlu0 %741
        %745 = vset.pattern.permute.xlu0 0
        %746 = vperm.xlu0 %745, %v738
        %v747 = vpop.permute.xlu0 %746
        %v749 = vmul.f32 %v731, %v742
        %v750 = vmul.f32 %v734, %v747
        %v751 = vld [vmem:[%s2] sm:$0x1]
        %v753 = vlaneseq
        %v754 = vshrl.u32 %v753, 7
        %v755 = vsub.s32 0, %v754
        %v756 = vrot.slane %v751, %v755
        %v758 = vadd.f32 %v749, %v756
        %v759 = vadd.f32 %v750, %v756
        %v760 = vmax.f32 %v758, 0.0
        %v761 = vmax.f32 %v759, 0.0
        %v762 = vadd.f32 %v403, %v760
        %v763 = vadd.f32 %v404, %v761
        %v764 = vld [vmem:[%s9] sm:$0xf]
        %v765 = vld [vmem:[%s9 + $0x4] sm:$0xf]
        %v766 = vld [vmem:[%s9 + $0x8] sm:$0xf]
        %v767 = vld [vmem:[%s9 + $0xc] sm:$0xf]
        %v768 = vld [vmem:[%s9 + $0x10] sm:$0xf]
        %v769 = vld [vmem:[%s9 + $0x14] sm:$0xf]
        %v770 = vld [vmem:[%s9 + $0x18] sm:$0xf]
        %v771 = vld [vmem:[%s9 + $0x1c] sm:$0xf]
        %v772 = vld [vmem:[%s9 + $0x20] sm:$0xf]
        %v773 = vld [vmem:[%s9 + $0x24] sm:$0xf]
        %v774 = vld [vmem:[%s9 + $0x28] sm:$0xf]
        %v775 = vld [vmem:[%s9 + $0x2c] sm:$0xf]
        %v776 = vld [vmem:[%s9 + $0x30] sm:$0xf]
        %v777 = vld [vmem:[%s9 + $0x34] sm:$0xf]
        %v778 = vld [vmem:[%s9 + $0x38] sm:$0xf]
        %v779 = vld [vmem:[%s9 + $0x3c] sm:$0xf]
        %v796 = vunpack.c.l.b16 %v764
        %v797 = vunpack.c.l.b16 %v765
        %v798 = vunpack.c.l.b16 %v766
        %v799 = vunpack.c.l.b16 %v767
        %v800 = vunpack.c.l.b16 %v768
        %v801 = vunpack.c.l.b16 %v769
        %v802 = vunpack.c.l.b16 %v770
        %v803 = vunpack.c.l.b16 %v771
        %v804 = vunpack.c.l.b16 %v772
        %v805 = vunpack.c.l.b16 %v773
        %v806 = vunpack.c.l.b16 %v774
        %v807 = vunpack.c.l.b16 %v775
        %v808 = vunpack.c.l.b16 %v776
        %v809 = vunpack.c.l.b16 %v777
        %v810 = vunpack.c.l.b16 %v778
        %v811 = vunpack.c.l.b16 %v779
        %v812 = vpack.c.b16 %v797, %v796
        %v813 = vpack.c.b16 %v799, %v798
        %v814 = vpack.c.b16 %v801, %v800
        %v815 = vpack.c.b16 %v803, %v802
        %v816 = vpack.c.b16 %v805, %v804
        %v817 = vpack.c.b16 %v807, %v806
        %v818 = vpack.c.b16 %v809, %v808
        %v819 = vpack.c.b16 %v811, %v810
        %828 = vmatprep.subr.bf16.mxu0 0
        %829 = vmatpush1.bf16.msra.mxu0 %v812
        %830 = vmatprep.subr.bf16.mxu0 0
        %831 = vmatpush1.bf16.msra.mxu0 %v813
        %832 = vmatprep.subr.bf16.mxu0 0
        %833 = vmatpush1.bf16.msra.mxu0 %v814
        %834 = vmatprep.subr.bf16.mxu0 0
        %835 = vmatpush1.bf16.msra.mxu0 %v815
        %836 = vmatprep.subr.bf16.mxu0 0
        %837 = vmatpush1.bf16.msra.mxu0 %v816
        %838 = vmatprep.subr.bf16.mxu0 0
        %839 = vmatpush1.bf16.msra.mxu0 %v817
        %840 = vmatprep.subr.bf16.mxu0 0
        %841 = vmatpush1.bf16.msra.mxu0 %v818
        %842 = vmatprep.subr.bf16.mxu0 0
        %843 = vmatpush1.bf16.msra.mxu0 %v819
        %844 = vmatprep.subr.bf16.mxu0 0
        %845 = vmatpush1.bf16.msra.mxu0 0
        %846 = vmatprep.subr.bf16.mxu0 0
        %847 = vmatpush1.bf16.msra.mxu0 0
        %848 = vmatprep.subr.bf16.mxu0 0
        %849 = vmatpush1.bf16.msra.mxu0 0
        %850 = vmatprep.subr.bf16.mxu0 0
        %851 = vmatpush1.bf16.msra.mxu0 0
        %852 = vmatprep.subr.bf16.mxu0 0
        %853 = vmatpush1.bf16.msra.mxu0 0
        %854 = vmatprep.subr.bf16.mxu0 0
        %855 = vmatpush1.bf16.msra.mxu0 0
        %856 = vmatprep.subr.bf16.mxu0 0
        %857 = vmatpush1.bf16.msra.mxu0 0
        %858 = vmatprep.subr.bf16.mxu0 0
        %859 = vmatpush1.bf16.msra.mxu0 0
        %860 = vmatprep.mubr.bf16.mxu0 0
        %861 = vmatmul.mubr.bf16.gmra.mrb[0].mxu0 %v409
        %v862 = vpop.f32.mrb[0].mxu0
        %v863 = vadd.f32 0.0, %v862
        %v864 = vpop.f32.mrb[0].mxu0
        %v865 = vpop.f32.mrb[0].mxu0
        %v866 = vadd.f32 0.0, %v865
        %v867 = vpop.f32.mrb[0].mxu0
        %868 = vdwg.mxu0
        %v869 = vld [vmem:[%s4] sm:$0xf]
        %v870 = vld [vmem:[%s4 + $0x4] sm:$0xf]
        %v871 = vld [vmem:[%s4 + $0x8] sm:$0xf]
        %v872 = vld [vmem:[%s4 + $0xc] sm:$0xf]
        %v873 = vpack.c.bf16 %v866, %v863
        %v878 = vunpack.c.l.b16 %v869
        %v879 = vunpack.c.l.b16 %v870
        %v880 = vunpack.c.l.b16 %v871
        %v881 = vunpack.c.l.b16 %v872
        %v882 = vpack.c.b16 %v879, %v878
        %v883 = vpack.c.b16 %v881, %v880
        %v885 = vsel %vm642, %v882, 0
        %v888 = vsel %vm642, %v883, 0
        %890 = vmatprep.subr.bf16.mxu0 0
        %891 = vmatpush1.bf16.msra.mxu0 %v873
        %892 = vmatprep.subr.bf16.mxu0 0
        %893 = vmatpush1.bf16.msra.mxu0 0
        %894 = vmatprep.subr.bf16.mxu0 0
        %895 = vmatpush1.bf16.msra.mxu0 0
        %896 = vmatprep.subr.bf16.mxu0 0
        %897 = vmatpush1.bf16.msra.mxu0 0
        %898 = vmatprep.subr.bf16.mxu0 0
        %899 = vmatpush1.bf16.msra.mxu0 0
        %900 = vmatprep.subr.bf16.mxu0 0
        %901 = vmatpush1.bf16.msra.mxu0 0
        %902 = vmatprep.subr.bf16.mxu0 0
        %903 = vmatpush1.bf16.msra.mxu0 0
        %904 = vmatprep.subr.bf16.mxu0 0
        %905 = vmatpush1.bf16.msra.mxu0 0
        %906 = vmatprep.subr.bf16.mxu0 0
        %907 = vmatpush1.bf16.msra.mxu0 0
        %908 = vmatprep.subr.bf16.mxu0 0
        %909 = vmatpush1.bf16.msra.mxu0 0
        %910 = vmatprep.subr.bf16.mxu0 0
        %911 = vmatpush1.bf16.msra.mxu0 0
        %912 = vmatprep.subr.bf16.mxu0 0
        %913 = vmatpush1.bf16.msra.mxu0 0
        %914 = vmatprep.subr.bf16.mxu0 0
        %915 = vmatpush1.bf16.msra.mxu0 0
        %916 = vmatprep.subr.bf16.mxu0 0
        %917 = vmatpush1.bf16.msra.mxu0 0
        %918 = vmatprep.subr.bf16.mxu0 0
        %919 = vmatpush1.bf16.msra.mxu0 0
        %920 = vmatprep.subr.bf16.mxu0 0
        %921 = vmatpush1.bf16.msra.mxu0 0
        %922 = vmatprep.mubr.bf16.mxu0 0
        %923 = vmatmul.mubr.bf16.gmra.mrb[0].mxu0 %v885
        %v924 = vpop.f32.mrb[0].mxu0
        %v925 = vadd.f32 0.0, %v924
        %v926 = vpop.f32.mrb[0].mxu0
        %v927 = vpop.f32.mrb[0].mxu0
        %v928 = vadd.f32 0.0, %v927
        %v929 = vpop.f32.mrb[0].mxu0
        %930 = vmatprep.mubr.bf16.mxu0 0
        %931 = vmatmul.mubr.bf16.gmra.mrb[0].mxu0 %v888
        %v932 = vpop.f32.mrb[0].mxu0
        %v933 = vadd.f32 0.0, %v932
        %v934 = vpop.f32.mrb[0].mxu0
        %v935 = vpop.f32.mrb[0].mxu0
        %v936 = vadd.f32 0.0, %v935
        %v937 = vpop.f32.mrb[0].mxu0
        %938 = vdwg.mxu0
        %v939 = vld [vmem:[%s8] sm:$0xff]
        %v940 = vld [vmem:[%s8 + $0x8] sm:$0xff]
        %v941 = vld [vmem:[%s8 + $0x10] sm:$0xff]
        %v942 = vld [vmem:[%s8 + $0x18] sm:$0xff]
        %944 = vset.pattern.permute.xlu0 0
        %945 = vperm.xlu0 %944, %v939
        %v946 = vpop.permute.xlu0 %945
        %949 = vset.pattern.permute.xlu0 0
        %950 = vperm.xlu0 %949, %v940
        %v951 = vpop.permute.xlu0 %950
        %954 = vset.pattern.permute.xlu0 0
        %955 = vperm.xlu0 %954, %v941
        %v956 = vpop.permute.xlu0 %955
        %959 = vset.pattern.permute.xlu0 0
        %960 = vperm.xlu0 %959, %v942
        %v961 = vpop.permute.xlu0 %960
        %v963 = vmul.f32 %v925, %v946
        %v964 = vmul.f32 %v928, %v951
        %v965 = vmul.f32 %v933, %v956
        %v966 = vmul.f32 %v936, %v961
        %v967 = vld [vmem:[%s3] sm:$0x1]
        %v969 = vlaneseq
        %v970 = vshrl.u32 %v969, 7
        %v971 = vsub.s32 0, %v970
        %v972 = vrot.slane %v967, %v971
        %v974 = vadd.f32 %v963, %v972
        %v975 = vadd.f32 %v964, %v972
        %v976 = vadd.f32 %v965, %v972
        %v977 = vadd.f32 %v966, %v972
        %v978 = vmax.f32 %v974, 0.0
        %v979 = vmax.f32 %v975, 0.0
        %v980 = vmax.f32 %v976, 0.0
        %v981 = vmax.f32 %v977, 0.0
        %v982 = vadd.f32 %v405, %v978
        %v983 = vadd.f32 %v406, %v979
        %v984 = vadd.f32 %v407, %v980
        %v985 = vadd.f32 %v408, %v981
        %986 = vst [vmem:[#allocation6] sm:$0xff] %v762
        %987 = vst [vmem:[#allocation6 + $0x8] sm:$0xff] %v763
        %988 = vst [vmem:[#allocation7] sm:$0xff] %v982
        %989 = vst [vmem:[#allocation7 + $0x8] sm:$0xff] %v983
        %990 = vst [vmem:[#allocation7 + $0x10] sm:$0xff] %v984
        %991 = vst [vmem:[#allocation7 + $0x18] sm:$0xff] %v985
        // Predicated region
        $region77: #{tpu_custom_call.1} parent=59 // pred_check
          %p992 = pneg %p251
        $region78: #{tpu_custom_call.1} parent=59 // pred_check_branch
          %994 = sbr.rel (%p992) target = $region80
        $region79: #{tpu_custom_call.1} parent=59 // pred_region
          %s996 = ssub.s32 256, 256
          %997 = vsyncadd [#allocation5], %s996
          %s998 = sshll.u32 [#allocation6], 4
          %s999 = int_to_ptr.vmem [resolvable:$true] %s998
          %1004 = dma.vmem_to_hbm [thread:$0]  %s999, 256, %s12, [#allocation5], 128, 128, 8
        $region80: #{tpu_custom_call.1} parent=59 // pred_fallthru
          _
        // Predicated region
        $region81: #{tpu_custom_call.1} parent=59 // pred_check
          %p1005 = pneg %p272
        $region82: #{tpu_custom_call.1} parent=59 // pred_check_branch
          %1007 = sbr.rel (%p1005) target = $region84
        $region83: #{tpu_custom_call.1} parent=59 // pred_region
          %s1009 = ssub.s32 512, 512
          %1010 = vsyncadd [#allocation8], %s1009
          %s1011 = sshll.u32 [#allocation7], 4
          %s1012 = int_to_ptr.vmem [resolvable:$true] %s1011
          %1017 = dma.vmem_to_hbm [thread:$0]  %s1012, 512, %s13, [#allocation8], 128, 128, 8
        $region84: #{tpu_custom_call.1} parent=59 // pred_fallthru
          _
        // Predicated region
        $region85: #{tpu_custom_call.1} parent=59 // pred_check
          %p1018 = pneg %p251
        $region86: #{tpu_custom_call.1} parent=59 // pred_check_branch
          %1020 = sbr.rel (%p1018) target = $region88
        $region87: #{tpu_custom_call.1} parent=59 // pred_region
          %1021 = dma.done [#allocation5], 256
        $region88: #{tpu_custom_call.1} parent=59 // pred_fallthru
          _
        // Predicated region
        $region89: #{tpu_custom_call.1} parent=59 // pred_check
          %p1022 = pneg %p272
        $region90: #{tpu_custom_call.1} parent=59 // pred_check_branch
          %1024 = sbr.rel (%p1022) target = $region92
        $region91: #{tpu_custom_call.1} parent=59 // pred_region
          %1025 = dma.done [#allocation8], 512
        $region92: #{tpu_custom_call.1} parent=59 // pred_fallthru
          _
      $region60: #{tpu_custom_call.1} parent=5 // pred_fallthru
        _
      %p1026 = scmp.le.s32.totalorder 2, %s23
      // Predicated region
      $region93: #{tpu_custom_call.1} parent=5 // pred_check
        %p1027 = pneg %p1026
      $region94: #{tpu_custom_call.1} parent=5 // pred_check_branch
        %1029 = sbr.rel (%p1027) target = $region96
      $region95: #{tpu_custom_call.1} parent=5 // pred_region
        %s1030 = ssub.s32 %s23, 2
      $region96: #{tpu_custom_call.1} parent=5 // pred_fallthru
        _
    $region6: #{tpu_custom_call.1} parent=1 // loop_footer
      %s27 = sadd.s32 1, %s23
    $region7: #{tpu_custom_call.1} parent=1 // loop_footer_branch
      %22 = sbr.rel target = $region3
    $region8: #{tpu_custom_call.1} parent=1 // loop_exit
      _
    %1031 = vsyncpa [#allocation4], 1
    %s1032 = scalar_lea.sflag [#allocation4], 1
    %1033 = vsyncpa %s1032, 1
    %1034 = vsyncpa [#allocation5], 1
    %s1035 = scalar_lea.sflag [#allocation5], 1
    %1036 = vsyncpa %s1035, 1
    %1037 = vsyncpa [#allocation8], 1
  %1038 = vsyncmov [#allocation2]
  %s1039 = vpop.sfrf %1038
  %p1040 = scmp.eq.s32.totalorder %s1039, 0
  %p1041 = pneg %p1040
  %1043 = shalt.err (%p1041)
  %s1044 = scalar_lea.sflag [#allocation2], 1
  %1045 = vsyncmov %s1044
  %s1046 = vpop.sfrf %1045
  %p1047 = scmp.eq.s32.totalorder %s1046, 0
  %p1048 = pneg %p1047
  %1050 = shalt.err (%p1048)

</llo_original>
